<compile_context>
chip_gen: v5e
topology: v5e:2x2
jax: 0.10.0
libtpu: 0.0.40
codegen_flags: <defaults>
</compile_context>

<pallas_src>
import jax
import jax.numpy as jnp
from jax.experimental import pallas as pl
from jax.experimental.pallas import tpu as pltpu


# ------------------------------------------------------------------ kernels --

def _linear_relu_kernel_fullk(x_ref, w_ref, b_ref, o_ref):
    """Single-pass K (tk == input_dim): no scratch accumulator, fused epilogue."""
    acc = jnp.dot(x_ref[...], w_ref[...], preferred_element_type=jnp.float32)
    out = acc + b_ref[...].astype(jnp.float32)
    o_ref[...] = jnp.maximum(out, 0.0).astype(o_ref.dtype)


def _linear_relu_kernel_kgrid(x_ref, w_ref, b_ref, o_ref, acc_ref):
    """Multi-step K reduction: f32 VMEM accumulator + pl.when init/epilogue."""
    k = pl.program_id(2)

    @pl.when(k == 0)
    def _():
        acc_ref[...] = jnp.zeros_like(acc_ref)

    acc_ref[...] += jnp.dot(x_ref[...], w_ref[...],
                            preferred_element_type=jnp.float32)

    @pl.when(k == pl.num_programs(2) - 1)
    def _():
        out = acc_ref[...] + b_ref[...].astype(jnp.float32)
        o_ref[...] = jnp.maximum(out, 0.0).astype(o_ref.dtype)


# -------------------------------------------------------------- tile helpers --

def _largest_exact_tile(dim, cap, grans=(256, 128)):
    """Full dim if <= cap, else the largest multiple of a preferred granularity
    that divides dim exactly.  Returns None if no exact tile <= cap exists."""
    if dim <= cap:
        return dim
    for g in grans:
        t = (cap // g) * g
        while t >= g:
            if dim % t == 0:
                return t
            t -= g
    return None


def _pick_m_tile(batch, cap=1024):
    if batch <= cap:
        return batch
    t = _largest_exact_tile(batch, cap, grans=(256, 128, 8))
    return t if t is not None else cap   # ragged trailing M block, masked store


def _vmem_budget_bytes():
    """Generation-aware VMEM request with headroom."""
    try:
        phys = int(pltpu.get_tpu_info().vmem_capacity_bytes)
    except Exception:
        phys = 64 * 1024 * 1024
    if phys <= 64 * 1024 * 1024:         # v7x: 64 MiB physical per TC
        return 48 * 1024 * 1024
    return 96 * 1024 * 1024              # v5e / v6e: 128 MiB physical


# ------------------------------------------------------------------ wrapper --

def generic_processor(x, weight, bias, *, tm=None, tn=None, tk=None,
                      compute_dtype=None, force_pallas=False):
    """relu(x @ weight.T + bias) with torch nn.Linear parameter layout.

    x:      [batch, input_dim]
    weight: [emb_dim, input_dim]   (torch layout)
    bias:   [emb_dim]
    """
    batch, input_dim = x.shape
    emb_dim, k_dim = weight.shape
    assert k_dim == input_dim, "weight must be [emb_dim, input_dim]"
    out_dtype = x.dtype

    # Tiny-problem fallback: per-call Pallas overhead dominates toy shapes.
    if not force_pallas and 2 * batch * input_dim * emb_dim < (1 << 20):
        return jnp.maximum(x @ weight.T + bias, 0.0).astype(out_dtype)

    # Optional reduced-precision streaming (accumulation stays f32 in-kernel).
    if compute_dtype is not None:
        x_c = x.astype(compute_dtype)
        w_c = weight.astype(compute_dtype)
    else:
        x_c, w_c = x, weight

    elt = jnp.dtype(x_c.dtype).itemsize
    budget = _vmem_budget_bytes()

    tm_user, tn_user = tm is not None, tn is not None

    def resident_bytes(tm_, tn_, tk_, with_acc):
        # double-buffered x, w, bias, out (+ f32 accumulator if K is gridded)
        r = 2 * (tm_ * tk_ + tk_ * tn_ + tn_ + tm_ * tn_) * elt
        if with_acc:
            r += tm_ * tn_ * 4
        return r

    # ---- tile selection ------------------------------------------------
    if tn is None:
        tn = _largest_exact_tile(emb_dim, 512, grans=(256, 128))
        if tn is None:
            tn = min(emb_dim, 512)       # ragged trailing N block, masked store
    if tm is None:
        tm = _pick_m_tile(batch, cap=1024)

    if tk is None:
        if resident_bytes(tm, tn, input_dim, with_acc=False) <= budget:
            tk = input_dim               # full-K: collapse the reduction axis
        else:
            cand = _largest_exact_tile(input_dim, 2048, grans=(256, 128))
            tk = cand if cand is not None else input_dim
            # shrink tk while it still divides K exactly (padded K is unsafe)
            while (tk < input_dim and tk > 256 and tk % 2 == 0
                   and input_dim % (tk // 2) == 0
                   and resident_bytes(tm, tn, tk, True) > budget):
                tk //= 2

    # Shrink tm / tn until the working set fits (rarely triggers).
    def _fits():
        return resident_bytes(tm, tn, tk, with_acc=(tk < input_dim)) <= budget

    while not _fits() and tm > 128:
        tm = max(128, ((tm // 2) // 8) * 8)
    while not _fits() and tn > 128:
        tn = max(128, ((tn // 2) // 128) * 128)

    # Guarantee >=2 blocks along a parallel axis so v7x's 2nd TC gets work
    # (split N first: it does not increase weight re-streaming).
    if (not tn_user and not tm_user
            and pl.cdiv(batch, tm) == 1 and pl.cdiv(emb_dim, tn) == 1):
        if tn >= 256 and (tn // 2) % 128 == 0:
            tn //= 2
        elif tm >= 16 and tm % 16 == 0:
            tm //= 2

    grid_m = pl.cdiv(batch, tm)
    grid_n = pl.cdiv(emb_dim, tn)
    grid_k = pl.cdiv(input_dim, tk)

    # One-time wrapper transpose -> canonical lane-dense [K, N] MXU RHS.
    w_t = w_c.T
    b2d = bias.reshape(1, emb_dim)

    w_elt = jnp.dtype(w_t.dtype).itemsize
    cost = pl.CostEstimate(
        flops=2 * batch * input_dim * emb_dim,
        transcendentals=0,
        bytes_accessed=int(batch * input_dim * elt * grid_n
                           + input_dim * emb_dim * w_elt * grid_m
                           + emb_dim * jnp.dtype(bias.dtype).itemsize * grid_m
                           + batch * emb_dim * jnp.dtype(out_dtype).itemsize),
    )

    out_shape = jax.ShapeDtypeStruct((batch, emb_dim), out_dtype)

    if grid_k == 1:
        # Single-pass K: 2-D fully-parallel grid, no scratch accumulator.
        return pl.pallas_call(
            _linear_relu_kernel_fullk,
            out_shape=out_shape,
            grid_spec=pltpu.PrefetchScalarGridSpec(
                num_scalar_prefetch=0,
                grid=(grid_m, grid_n),
                in_specs=[
                    pl.BlockSpec((tm, tk), lambda i, j: (i, 0)),   # x
                    pl.BlockSpec((tk, tn), lambda i, j: (0, j)),   # W.T  [K, N]
                    pl.BlockSpec((1, tn), lambda i, j: (0, j)),    # bias
                ],
                out_specs=pl.BlockSpec((tm, tn), lambda i, j: (i, j)),
            ),
            compiler_params=pltpu.CompilerParams(
                dimension_semantics=("parallel", "parallel"),
                vmem_limit_bytes=budget,
            ),
            cost_estimate=cost,
        )(x_c, w_t, b2d)

    # Gridded K reduction: trailing "arbitrary" axis + f32 VMEM accumulator.
    return pl.pallas_call(
        _linear_relu_kernel_kgrid,
        out_shape=out_shape,
        grid_spec=pltpu.PrefetchScalarGridSpec(
            num_scalar_prefetch=0,
            grid=(grid_m, grid_n, grid_k),
            in_specs=[
                pl.BlockSpec((tm, tk), lambda i, j, k: (i, k)),    # x
                pl.BlockSpec((tk, tn), lambda i, j, k: (k, j)),    # W.T  [K, N]
                pl.BlockSpec((1, tn), lambda i, j, k: (0, j)),     # bias
            ],
            out_specs=pl.BlockSpec((tm, tn), lambda i, j, k: (i, j)),
            scratch_shapes=[pltpu.VMEM((tm, tn), jnp.float32)],
        ),
        compiler_params=pltpu.CompilerParams(
            dimension_semantics=("parallel", "parallel", "arbitrary"),
            vmem_limit_bytes=budget,
        ),
        cost_estimate=cost,
    )(x_c, w_t, b2d)


# --------------------------------------------------------------------- main --

if __name__ == "__main__":
    # A batch of flattened 32x32 "images" mapped to a 256-d embedding.
    batch, input_dim, emb_dim = 64, 1024, 256

    key = jax.random.PRNGKey(0)
    kx, kw, kb = jax.random.split(key, 3)

    x = jax.random.normal(kx, (batch, input_dim), dtype=jnp.float32)
    bound = 1.0 / (input_dim ** 0.5)
    weight = jax.random.uniform(kw, (emb_dim, input_dim),
                                minval=-bound, maxval=bound, dtype=jnp.float32)
    bias = jax.random.uniform(kb, (emb_dim,),
                              minval=-bound, maxval=bound, dtype=jnp.float32)

    out = generic_processor(x, weight, bias, force_pallas=True)
    out = jax.block_until_ready(out)

    # Reference check against plain JAX (same math as F.relu(fc(x))).
    ref = jnp.maximum(x @ weight.T + bias, 0.0)
    assert out.shape == (batch, emb_dim)
    assert jnp.allclose(out, ref, atol=1e-4, rtol=1e-4)

    print("KERNEL_OK")
</pallas_src>

<mosaic_0001>
module attributes {stable_mosaic.version = 11 : i64} {
  func.func @_linear_relu_kernel_fullk(%arg0: i32, %arg1: i32, %arg2: memref<64x1024xf32, #tpu.memory_space<vmem>>, %arg3: memref<1024x128xf32, #tpu.memory_space<vmem>>, %arg4: memref<1x128xf32, #tpu.memory_space<vmem>>, %arg5: memref<64x128xf32, #tpu.memory_space<vmem>>) attributes {dimension_semantics = [#tpu.dimension_semantics<parallel>, #tpu.dimension_semantics<parallel>], iteration_bounds = array<i64: 1, 2>, scalar_prefetch = 0 : i64, scratch_operands = 0 : i64, tpu.core_type = #tpu.core_type<tc>, window_params = [{transform_indices = @transform_0, window_bounds = array<i64: 64, 1024>}, {transform_indices = @transform_1, window_bounds = array<i64: 1024, 128>}, {transform_indices = @transform_2, window_bounds = array<i64: 1, 128>}, {transform_indices = @transform_3, window_bounds = array<i64: 64, 128>}]} {
    %c0 = arith.constant 0 : index
    %c0_0 = arith.constant 0 : index
    %0 = vector.load %arg2[%c0, %c0_0] : memref<64x1024xf32, #tpu.memory_space<vmem>>, vector<64x1024xf32>
    %c0_1 = arith.constant 0 : index
    %c0_2 = arith.constant 0 : index
    %1 = vector.load %arg3[%c0_1, %c0_2] : memref<1024x128xf32, #tpu.memory_space<vmem>>, vector<1024x128xf32>
    %cst = arith.constant dense<0.000000e+00> : vector<64x128xf32>
    %2 = tpu.matmul %0, %1, %cst {dimension_numbers = #tpu.dot_dimension_numbers<[1], [0], [0], [1], [0, 0, 1, 1], [], []>} : vector<64x1024xf32>, vector<1024x128xf32>, vector<64x128xf32> -> vector<64x128xf32>
    %c0_3 = arith.constant 0 : index
    %c0_4 = arith.constant 0 : index
    %3 = vector.load %arg4[%c0_3, %c0_4] : memref<1x128xf32, #tpu.memory_space<vmem>>, vector<1x128xf32>
    %4 = vector.broadcast %3 : vector<1x128xf32> to vector<64x128xf32>
    %5 = arith.addf %2, %4 : vector<64x128xf32>
    %cst_5 = arith.constant 0.000000e+00 : f32
    %6 = vector.broadcast %cst_5 : f32 to vector<64x128xf32>
    %7 = arith.maximumf %5, %6 : vector<64x128xf32>
    %c0_6 = arith.constant 0 : index
    %c0_7 = arith.constant 0 : index
    %8 = vector.load %arg5[%c0_6, %c0_7] : memref<64x128xf32, #tpu.memory_space<vmem>>, vector<64x128xf32>
    tpu.vector_store %arg5[%c0_6, %c0_7], %7 {strides = array<i32>} : memref<64x128xf32, #tpu.memory_space<vmem>>, vector<64x128xf32>,
    return
  }
  func.func @transform_0(%arg0: i32, %arg1: i32) -> (i32, i32) {
    %c0_i32 = arith.constant 0 : i32
    %c0_i32_0 = arith.constant 0 : i32
    return %arg0, %c0_i32 : i32, i32
  }
  func.func @transform_1(%arg0: i32, %arg1: i32) -> (i32, i32) {
    %c0_i32 = arith.constant 0 : i32
    %c0_i32_0 = arith.constant 0 : i32
    return %c0_i32, %arg1 : i32, i32
  }
  func.func @transform_2(%arg0: i32, %arg1: i32) -> (i32, i32) {
    %c0_i32 = arith.constant 0 : i32
    %c0_i32_0 = arith.constant 0 : i32
    return %c0_i32, %arg1 : i32, i32
  }
  func.func @transform_3(%arg0: i32, %arg1: i32) -> (i32, i32) {
    %c0_i32 = arith.constant 0 : i32
    return %arg0, %arg1 : i32, i32
  }
}

</mosaic_0001>

<llo_original>
// kernel: tpu_custom_call.1
$region0: #{tpu_custom_call.1}
  #allocation0 [shape = 'u32[]', space=smem, size = 0x4, offset = 0x4, fixed_abs, tag = 'smem constant byte address 0x4 - core index']
  #allocation1 [shape = 'u32[72,128]{1,0:T(1,128)}', space=vmem, size = 0x9000, scoped, tag = 'internal scratch']
  %s0 = inlined_call_operand.hbm [shape: f32[64,1024], index: 0, kind: input, shape index: {}]
  %s1 = inlined_call_operand.hbm [shape: f32[1024,256], index: 1, kind: input, shape index: {}]
  %s2 = inlined_call_operand.hbm [shape: f32[1,256], index: 2, kind: input, shape index: {}]
  %s3 = inlined_call_operand.hbm [shape: f32[64,256], index: 3, kind: output, shape index: {}]
  %s4 = sld [smem:[#allocation0]]
  $region57: #{tpu_custom_call.1} parent=0
    _
  %s6 = ssub.s32 1, %s4
  %s7 = scalar_select 0, %s6, %s4
  $region1: #{tpu_custom_call.1} parent=0
    #allocation2 [shape = 'u8[262144]{0}', space=vmem, size = 0x40000, scoped, tag = 'input window, operand 0, single buffered']
    #allocation3 [shape = 's32[2]{0}', space=sflag, size = 0x8, scoped, tag = 'scoped memory for tpu_custom_call.1']
    #allocation4 [shape = 's32[2]{0}', space=sflag, size = 0x8, scoped, tag = 'scoped memory for tpu_custom_call.1']
    #allocation5 [shape = 'u8[1048576]{0}', space=vmem, size = 0x100000, scoped, tag = 'input window, operand 1']
    #allocation6 [shape = 's32[2]{0}', space=sflag, size = 0x8, scoped, tag = 'scoped memory for tpu_custom_call.1']
    #allocation7 [shape = 'u8[1024]{0}', space=vmem, size = 0x400, scoped, tag = 'input window, operand 2']
    #allocation8 [shape = 'u8[65536]{0}', space=vmem, size = 0x10000, scoped, tag = 'output window, operand 0']
    %8 = vsyncpa [#allocation3], 0
    %9 = vsyncpa [#allocation6], 0
    %s10 = scalar_lea.sflag [#allocation6], 1
    %11 = vsyncpa %s10, 0
    %12 = vsyncpa [#allocation4], 0
    %s13 = scalar_lea.sflag [#allocation4], 1
    %14 = vsyncpa %s13, 0
    loop: start=0, step=1, limit=4
    $region2: #{tpu_custom_call.1} parent=1 // loop_pre_header
      _
    $region3: #{tpu_custom_call.1} parent=1 // loop_header
      %s16 = sphi 0, %s20
      %p17 = scmp.ge.s32.totalorder %s16, 4
      %s23 = sphi 0, %s35
      %s24 = sphi 0, %s31
      %s25 = sphi 0, %s23
      %s26 = sphi 0, %s24
      %s27 = sphi 0, %s25
      %s28 = sphi 0, %s26
      %s38 = sphi 0, %s40
      %s41 = sphi 0, %s38
      %s42 = sphi 0, %s41
      %s58 = sphi 0, %s42
      %s64 = sphi 0, %s66
      %s67 = sphi 0, %s64
      %s68 = sphi 0, %s67
      %s84 = sphi 0, %s68
      %s90 = sphi 0, %s92
      %s93 = sphi 0, %s90
      %s94 = sphi 0, %s93
      %s110 = sphi 0, %s94
      %s118 = sphi 0, %s120
      %s121 = sphi 0, %s118
      %s122 = sphi 0, %s121
      %s138 = sphi 0, %s122
    $region4: #{tpu_custom_call.1} parent=1 // loop_header_branch
      %19 = sbr.rel (%p17) target = $region8
    $region5: #{tpu_custom_call.1} parent=1 // loop_body
      %s21 = ssub.s32 %s16, 1
      %s22 = ssub.s32 %s16, 2
      %s29 = sadd.s32 1, %s24
      %p30 = scmp.ge.s32.totalorder %s29, 2
      %s31 = scalar_select %p30, 0, %s29
      %s32 = sadd.s32 1, %s23
      %s33 = scalar_select %p30, %s32, %s23
      %p34 = scmp.ge.s32.totalorder %s33, 1
      %s35 = scalar_select %p34, 0, %s33
      %s36 = ssub.s32 %s23, %s35
      %p37 = scmp.eq.s32.totalorder %s36, 0
      %s39 = sadd.s32 %s38, 1
      %s40 = scalar_select %p37, %s38, %s39
      %p43 = pneg %p37
      %p44 = scmp.eq.s32.totalorder %s16, 1
      %p45 = por %p43, %p44
      %p46 = scmp.ne.s32.totalorder %s38, %s41
      %p47 = scmp.eq.s32.totalorder %s16, 0
      %p48 = por %p46, %p47
      %p49 = scmp.ne.s32.totalorder %s38, %s41
      %p50 = scmp.eq.s32.totalorder %s21, 1
      %p51 = por %p49, %p50
      %p52 = scmp.ne.s32.totalorder %s41, %s42
      %p53 = scmp.eq.s32.totalorder %s21, 0
      %p54 = por %p52, %p53
      %p55 = scmp.ne.s32.totalorder %s41, %s42
      %p56 = scmp.eq.s32.totalorder %s22, 1
      %p57 = por %p55, %p56
      %p59 = scmp.ne.s32.totalorder %s42, %s58
      %p60 = scmp.eq.s32.totalorder %s22, 0
      %p61 = por %p59, %p60
      %s62 = ssub.s32 %s24, %s31
      %p63 = scmp.eq.s32.totalorder %s62, 0
      %s65 = sadd.s32 %s64, 1
      %s66 = scalar_select %p63, %s64, %s65
      %p69 = pneg %p63
      %p70 = scmp.eq.s32.totalorder %s16, 1
      %p71 = por %p69, %p70
      %p72 = scmp.ne.s32.totalorder %s64, %s67
      %p73 = scmp.eq.s32.totalorder %s16, 0
      %p74 = por %p72, %p73
      %p75 = scmp.ne.s32.totalorder %s64, %s67
      %p76 = scmp.eq.s32.totalorder %s21, 1
      %p77 = por %p75, %p76
      %p78 = scmp.ne.s32.totalorder %s67, %s68
      %p79 = scmp.eq.s32.totalorder %s21, 0
      %p80 = por %p78, %p79
      %p81 = scmp.ne.s32.totalorder %s67, %s68
      %p82 = scmp.eq.s32.totalorder %s22, 1
      %p83 = por %p81, %p82
      %p85 = scmp.ne.s32.totalorder %s68, %s84
      %p86 = scmp.eq.s32.totalorder %s22, 0
      %p87 = por %p85, %p86
      %s88 = ssub.s32 %s24, %s31
      %p89 = scmp.eq.s32.totalorder %s88, 0
      %s91 = sadd.s32 %s90, 1
      %s92 = scalar_select %p89, %s90, %s91
      %p95 = pneg %p89
      %p96 = scmp.eq.s32.totalorder %s16, 1
      %p97 = por %p95, %p96
      %p98 = scmp.ne.s32.totalorder %s90, %s93
      %p99 = scmp.eq.s32.totalorder %s16, 0
      %p100 = por %p98, %p99
      %p101 = scmp.ne.s32.totalorder %s90, %s93
      %p102 = scmp.eq.s32.totalorder %s21, 1
      %p103 = por %p101, %p102
      %p104 = scmp.ne.s32.totalorder %s93, %s94
      %p105 = scmp.eq.s32.totalorder %s21, 0
      %p106 = por %p104, %p105
      %p107 = scmp.ne.s32.totalorder %s93, %s94
      %p108 = scmp.eq.s32.totalorder %s22, 1
      %p109 = por %p107, %p108
      %p111 = scmp.ne.s32.totalorder %s94, %s110
      %p112 = scmp.eq.s32.totalorder %s22, 0
      %p113 = por %p111, %p112
      %s114 = ssub.s32 %s23, %s35
      %s115 = ssub.s32 %s24, %s31
      %s116 = sor.u32 %s114, %s115
      %p117 = scmp.eq.s32.totalorder %s116, 0
      %s119 = sadd.s32 %s118, 1
      %s120 = scalar_select %p117, %s118, %s119
      %p123 = pneg %p117
      %p124 = scmp.eq.s32.totalorder %s16, 1
      %p125 = por %p123, %p124
      %p126 = scmp.ne.s32.totalorder %s118, %s121
      %p127 = scmp.eq.s32.totalorder %s16, 0
      %p128 = por %p126, %p127
      %p129 = scmp.ne.s32.totalorder %s118, %s121
      %p130 = scmp.eq.s32.totalorder %s21, 1
      %p131 = por %p129, %p130
      %p132 = scmp.ne.s32.totalorder %s121, %s122
      %p133 = scmp.eq.s32.totalorder %s21, 0
      %p134 = por %p132, %p133
      %p135 = scmp.ne.s32.totalorder %s121, %s122
      %p136 = scmp.eq.s32.totalorder %s22, 1
      %p137 = por %p135, %p136
      %p139 = scmp.ne.s32.totalorder %s122, %s138
      %p140 = scmp.eq.s32.totalorder %s22, 0
      %p141 = por %p139, %p140
      %p142 = scmp.le.s32.totalorder 1, %s16
      %p143 = scmp.lt.s32.totalorder %s16, 3
      %p144 = pnand %p142, %p143
      %p145 = pneg %p144
      // Predicated region
      $region9: #{tpu_custom_call.1} parent=5 // pred_check
        _
      $region10: #{tpu_custom_call.1} parent=5 // pred_check_branch
        %147 = sbr.rel (%p144) target = $region12
      $region11: #{tpu_custom_call.1} parent=5 // pred_region
        %s148 = ssub.s32 %s16, 1
        // Predicated region
        $region13: #{tpu_custom_call.1} parent=11 // pred_check
          %p149 = pneg %p54
        $region14: #{tpu_custom_call.1} parent=11 // pred_check_branch
          %151 = sbr.rel (%p149) target = $region16
        $region15: #{tpu_custom_call.1} parent=11 // pred_region
          %s152 = smul.u32 8, %s25
          %154 = vsyncadd [#allocation3], 0
          %s155 = smul.addr %s152, 8
          %s156 = smul.addr %s155, 8
          %s157 = scalar_lea.hbm %s0, %s156
          %s158 = sshll.u32 %s157, 4
          %s159 = int_to_ptr.hbm [resolvable:$true] %s158
          %s160 = sshll.u32 [#allocation2], 4
          %s161 = int_to_ptr.vmem [resolvable:$true] %s160
          %166 = dma.hbm_to_vmem [thread:$0]  %s159, 8192, %s161, [#allocation3], 1024, 1024, 64
        $region16: #{tpu_custom_call.1} parent=11 // pred_fallthru
          _
      $region12: #{tpu_custom_call.1} parent=5 // pred_fallthru
        _
      %p167 = scmp.lt.s32.totalorder %s16, 2
      // Predicated region
      $region17: #{tpu_custom_call.1} parent=5 // pred_check
        %p168 = pneg %p167
      $region18: #{tpu_custom_call.1} parent=5 // pred_check_branch
        %170 = sbr.rel (%p168) target = $region20
      $region19: #{tpu_custom_call.1} parent=5 // pred_region
        // Predicated region
        $region21: #{tpu_custom_call.1} parent=19 // pred_check
          %p171 = pneg %p74
        $region22: #{tpu_custom_call.1} parent=19 // pred_check_branch
          %173 = sbr.rel (%p171) target = $region24
        $region23: #{tpu_custom_call.1} parent=19 // pred_region
          %s174 = sand.u32 %s16, 1
          %s175 = scalar_lea.sflag [#allocation6], %s174
          %s176 = sand.u32 %s64, 1
          %s177 = smul.addr %s176, 1024
          %s178 = scalar_lea.vmem [#allocation5], %s177
          %180 = vsyncadd %s175, 0
          %s181 = smul.addr %s24, 8
          %s182 = scalar_lea.hbm %s1, %s181
          %s183 = sshll.u32 %s182, 4
          %s184 = int_to_ptr.hbm [resolvable:$true] %s183
          %s185 = sshll.u32 %s178, 4
          %s186 = int_to_ptr.vmem [resolvable:$true] %s185
          %191 = dma.hbm_to_vmem [thread:$0]  %s184, 16384, %s186, %s175, 256, 128, 8
        $region24: #{tpu_custom_call.1} parent=19 // pred_fallthru
          _
        // Predicated region
        $region25: #{tpu_custom_call.1} parent=19 // pred_check
          %p192 = pneg %p100
        $region26: #{tpu_custom_call.1} parent=19 // pred_check_branch
          %194 = sbr.rel (%p192) target = $region28
        $region27: #{tpu_custom_call.1} parent=19 // pred_region
          %s195 = sand.u32 %s16, 1
          %s196 = scalar_lea.sflag [#allocation6], %s195
          %s197 = sand.u32 %s90, 1
          %s198 = scalar_lea.vmem [#allocation7], %s197
          %200 = vsyncadd %s196, 0
          %s201 = scalar_lea.hbm %s2, %s24
          %s203 = sshll.u32 %s201, 4
          %s204 = int_to_ptr.hbm [resolvable:$true] %s203
          %s205 = sshll.u32 %s198, 4
          %s206 = int_to_ptr.vmem [resolvable:$true] %s205
          %208 = dma.hbm_to_vmem [thread:$0]  %s204, 16, %s206, %s196
        $region28: #{tpu_custom_call.1} parent=19 // pred_fallthru
          _
      $region20: #{tpu_custom_call.1} parent=5 // pred_fallthru
        _
      %p209 = scmp.le.s32.totalorder 1, %s16
      %p210 = scmp.lt.s32.totalorder %s16, 3
      %p211 = pnand %p209, %p210
      %p212 = pneg %p211
      // Predicated region
      $region29: #{tpu_custom_call.1} parent=5 // pred_check
        _
      $region30: #{tpu_custom_call.1} parent=5 // pred_check_branch
        %214 = sbr.rel (%p211) target = $region32
      $region31: #{tpu_custom_call.1} parent=5 // pred_region
        %s215 = ssub.s32 %s16, 1
        // Predicated region
        $region33: #{tpu_custom_call.1} parent=31 // pred_check
          %p216 = pneg %p54
        $region34: #{tpu_custom_call.1} parent=31 // pred_check_branch
          %218 = sbr.rel (%p216) target = $region36
        $region35: #{tpu_custom_call.1} parent=31 // pred_region
          %220 = dma.done [#allocation3], 8192
        $region36: #{tpu_custom_call.1} parent=31 // pred_fallthru
          _
        %s221 = sand.u32 %s21, 1
        %s222 = scalar_lea.sflag [#allocation6], %s221
        %s223 = sand.u32 %s67, 1
        %s224 = smul.addr %s223, 1024
        %s225 = scalar_lea.vmem [#allocation5], %s224
        // Predicated region
        $region37: #{tpu_custom_call.1} parent=31 // pred_check
          %p226 = pneg %p80
        $region38: #{tpu_custom_call.1} parent=31 // pred_check_branch
          %228 = sbr.rel (%p226) target = $region40
        $region39: #{tpu_custom_call.1} parent=31 // pred_region
          %230 = dma.done %s222, 16384
        $region40: #{tpu_custom_call.1} parent=31 // pred_fallthru
          _
        %s231 = sand.u32 %s21, 1
        %s232 = scalar_lea.sflag [#allocation6], %s231
        %s233 = sand.u32 %s93, 1
        %s234 = scalar_lea.vmem [#allocation7], %s233
        // Predicated region
        $region41: #{tpu_custom_call.1} parent=31 // pred_check
          %p235 = pneg %p106
        $region42: #{tpu_custom_call.1} parent=31 // pred_check_branch
          %237 = sbr.rel (%p235) target = $region44
        $region43: #{tpu_custom_call.1} parent=31 // pred_region
          %239 = dma.done %s232, 16
        $region44: #{tpu_custom_call.1} parent=31 // pred_fallthru
          _
        %p240 = pneg %p54
        %p241 = pneg %p51
        %s242 = sand.u32 %s21, 1
        %s243 = scalar_lea.sflag [#allocation6], %s242
        %s244 = sand.u32 %s67, 1
        %s245 = smul.addr %s244, 1024
        %s246 = scalar_lea.vmem [#allocation5], %s245
        %p247 = pneg %p80
        %p248 = pneg %p77
        %s249 = sand.u32 %s21, 1
        %s250 = scalar_lea.sflag [#allocation6], %s249
        %s251 = sand.u32 %s93, 1
        %s252 = scalar_lea.vmem [#allocation7], %s251
        %p253 = pneg %p106
        %p254 = pneg %p103
        %p255 = pneg %p134
        %p256 = pneg %p131
        %s257 = sand.u32 %s121, 1
        %s258 = scalar_lea.sflag [#allocation4], %s257
        %s259 = sand.u32 %s121, 1
        %s260 = smul.addr %s259, 64
        %s261 = scalar_lea.vmem [#allocation8], %s260
        %s262 = smul.u32 8, %s25
        %s263 = smul.u32 8, %s25
        %v264 = vld [vmem:[#allocation2] sm:$0xff]
        %v265 = vld [vmem:[#allocation2 + $0x8] sm:$0xff]
        %v266 = vld [vmem:[#allocation2 + $0x10] sm:$0xff]
        %v267 = vld [vmem:[#allocation2 + $0x18] sm:$0xff]
        %v268 = vld [vmem:[#allocation2 + $0x20] sm:$0xff]
        %v269 = vld [vmem:[#allocation2 + $0x28] sm:$0xff]
        %v270 = vld [vmem:[#allocation2 + $0x30] sm:$0xff]
        %v271 = vld [vmem:[#allocation2 + $0x38] sm:$0xff]
        %v272 = vld [vmem:[#allocation2 + $0x40] sm:$0xff]
        %v273 = vld [vmem:[#allocation2 + $0x48] sm:$0xff]
        %v274 = vld [vmem:[#allocation2 + $0x50] sm:$0xff]
        %v275 = vld [vmem:[#allocation2 + $0x58] sm:$0xff]
        %v276 = vld [vmem:[#allocation2 + $0x60] sm:$0xff]
        %v277 = vld [vmem:[#allocation2 + $0x68] sm:$0xff]
        %v278 = vld [vmem:[#allocation2 + $0x70] sm:$0xff]
        %v279 = vld [vmem:[#allocation2 + $0x78] sm:$0xff]
        %v280 = vld [vmem:[#allocation2 + $0x80] sm:$0xff]
        %v281 = vld [vmem:[#allocation2 + $0x88] sm:$0xff]
        %v282 = vld [vmem:[#allocation2 + $0x90] sm:$0xff]
        %v283 = vld [vmem:[#allocation2 + $0x98] sm:$0xff]
        %v284 = vld [vmem:[#allocation2 + $0xa0] sm:$0xff]
        %v285 = vld [vmem:[#allocation2 + $0xa8] sm:$0xff]
        %v286 = vld [vmem:[#allocation2 + $0xb0] sm:$0xff]
        %v287 = vld [vmem:[#allocation2 + $0xb8] sm:$0xff]
        %v288 = vld [vmem:[#allocation2 + $0xc0] sm:$0xff]
        %v289 = vld [vmem:[#allocation2 + $0xc8] sm:$0xff]
        %v290 = vld [vmem:[#allocation2 + $0xd0] sm:$0xff]
        %v291 = vld [vmem:[#allocation2 + $0xd8] sm:$0xff]
        %v292 = vld [vmem:[#allocation2 + $0xe0] sm:$0xff]
        %v293 = vld [vmem:[#allocation2 + $0xe8] sm:$0xff]
        %v294 = vld [vmem:[#allocation2 + $0xf0] sm:$0xff]
        %v295 = vld [vmem:[#allocation2 + $0xf8] sm:$0xff]
        %v296 = vld [vmem:[#allocation2 + $0x100] sm:$0xff]
        %v297 = vld [vmem:[#allocation2 + $0x108] sm:$0xff]
        %v298 = vld [vmem:[#allocation2 + $0x110] sm:$0xff]
        %v299 = vld [vmem:[#allocation2 + $0x118] sm:$0xff]
        %v300 = vld [vmem:[#allocation2 + $0x120] sm:$0xff]
        %v301 = vld [vmem:[#allocation2 + $0x128] sm:$0xff]
        %v302 = vld [vmem:[#allocation2 + $0x130] sm:$0xff]
        %v303 = vld [vmem:[#allocation2 + $0x138] sm:$0xff]
        %v304 = vld [vmem:[#allocation2 + $0x140] sm:$0xff]
        %v305 = vld [vmem:[#allocation2 + $0x148] sm:$0xff]
        %v306 = vld [vmem:[#allocation2 + $0x150] sm:$0xff]
        %v307 = vld [vmem:[#allocation2 + $0x158] sm:$0xff]
        %v308 = vld [vmem:[#allocation2 + $0x160] sm:$0xff]
        %v309 = vld [vmem:[#allocation2 + $0x168] sm:$0xff]
        %v310 = vld [vmem:[#allocation2 + $0x170] sm:$0xff]
        %v311 = vld [vmem:[#allocation2 + $0x178] sm:$0xff]
        %v312 = vld [vmem:[#allocation2 + $0x180] sm:$0xff]
        %v313 = vld [vmem:[#allocation2 + $0x188] sm:$0xff]
        %v314 = vld [vmem:[#allocation2 + $0x190] sm:$0xff]
        %v315 = vld [vmem:[#allocation2 + $0x198] sm:$0xff]
        %v316 = vld [vmem:[#allocation2 + $0x1a0] sm:$0xff]
        %v317 = vld [vmem:[#allocation2 + $0x1a8] sm:$0xff]
        %v318 = vld [vmem:[#allocation2 + $0x1b0] sm:$0xff]
        %v319 = vld [vmem:[#allocation2 + $0x1b8] sm:$0xff]
        %v320 = vld [vmem:[#allocation2 + $0x1c0] sm:$0xff]
        %v321 = vld [vmem:[#allocation2 + $0x1c8] sm:$0xff]
        %v322 = vld [vmem:[#allocation2 + $0x1d0] sm:$0xff]
        %v323 = vld [vmem:[#allocation2 + $0x1d8] sm:$0xff]
        %v324 = vld [vmem:[#allocation2 + $0x1e0] sm:$0xff]
        %v325 = vld [vmem:[#allocation2 + $0x1e8] sm:$0xff]
        %v326 = vld [vmem:[#allocation2 + $0x1f0] sm:$0xff]
        %v327 = vld [vmem:[#allocation2 + $0x1f8] sm:$0xff]
        %v328 = vld [vmem:[%s225] sm:$0xff]
        %v329 = vld [vmem:[%s225 + $0x8] sm:$0xff]
        %v330 = vld [vmem:[%s225 + $0x10] sm:$0xff]
        %v331 = vld [vmem:[%s225 + $0x18] sm:$0xff]
        %v332 = vld [vmem:[%s225 + $0x20] sm:$0xff]
        %v333 = vld [vmem:[%s225 + $0x28] sm:$0xff]
        %v334 = vld [vmem:[%s225 + $0x30] sm:$0xff]
        %v335 = vld [vmem:[%s225 + $0x38] sm:$0xff]
        %v336 = vld [vmem:[%s225 + $0x40] sm:$0xff]
        %v337 = vld [vmem:[%s225 + $0x48] sm:$0xff]
        %v338 = vld [vmem:[%s225 + $0x50] sm:$0xff]
        %v339 = vld [vmem:[%s225 + $0x58] sm:$0xff]
        %v340 = vld [vmem:[%s225 + $0x60] sm:$0xff]
        %v341 = vld [vmem:[%s225 + $0x68] sm:$0xff]
        %v342 = vld [vmem:[%s225 + $0x70] sm:$0xff]
        %v343 = vld [vmem:[%s225 + $0x78] sm:$0xff]
        %v344 = vld [vmem:[%s225 + $0x80] sm:$0xff]
        %v345 = vld [vmem:[%s225 + $0x88] sm:$0xff]
        %v346 = vld [vmem:[%s225 + $0x90] sm:$0xff]
        %v347 = vld [vmem:[%s225 + $0x98] sm:$0xff]
        %v348 = vld [vmem:[%s225 + $0xa0] sm:$0xff]
        %v349 = vld [vmem:[%s225 + $0xa8] sm:$0xff]
        %v350 = vld [vmem:[%s225 + $0xb0] sm:$0xff]
        %v351 = vld [vmem:[%s225 + $0xb8] sm:$0xff]
        %v352 = vld [vmem:[%s225 + $0xc0] sm:$0xff]
        %v353 = vld [vmem:[%s225 + $0xc8] sm:$0xff]
        %v354 = vld [vmem:[%s225 + $0xd0] sm:$0xff]
        %v355 = vld [vmem:[%s225 + $0xd8] sm:$0xff]
        %v356 = vld [vmem:[%s225 + $0xe0] sm:$0xff]
        %v357 = vld [vmem:[%s225 + $0xe8] sm:$0xff]
        %v358 = vld [vmem:[%s225 + $0xf0] sm:$0xff]
        %v359 = vld [vmem:[%s225 + $0xf8] sm:$0xff]
        %v360 = vld [vmem:[%s225 + $0x100] sm:$0xff]
        %v361 = vld [vmem:[%s225 + $0x108] sm:$0xff]
        %v362 = vld [vmem:[%s225 + $0x110] sm:$0xff]
        %v363 = vld [vmem:[%s225 + $0x118] sm:$0xff]
        %v364 = vld [vmem:[%s225 + $0x120] sm:$0xff]
        %v365 = vld [vmem:[%s225 + $0x128] sm:$0xff]
        %v366 = vld [vmem:[%s225 + $0x130] sm:$0xff]
        %v367 = vld [vmem:[%s225 + $0x138] sm:$0xff]
        %v368 = vld [vmem:[%s225 + $0x140] sm:$0xff]
        %v369 = vld [vmem:[%s225 + $0x148] sm:$0xff]
        %v370 = vld [vmem:[%s225 + $0x150] sm:$0xff]
        %v371 = vld [vmem:[%s225 + $0x158] sm:$0xff]
        %v372 = vld [vmem:[%s225 + $0x160] sm:$0xff]
        %v373 = vld [vmem:[%s225 + $0x168] sm:$0xff]
        %v374 = vld [vmem:[%s225 + $0x170] sm:$0xff]
        %v375 = vld [vmem:[%s225 + $0x178] sm:$0xff]
        %v376 = vld [vmem:[%s225 + $0x180] sm:$0xff]
        %v377 = vld [vmem:[%s225 + $0x188] sm:$0xff]
        %v378 = vld [vmem:[%s225 + $0x190] sm:$0xff]
        %v379 = vld [vmem:[%s225 + $0x198] sm:$0xff]
        %v380 = vld [vmem:[%s225 + $0x1a0] sm:$0xff]
        %v381 = vld [vmem:[%s225 + $0x1a8] sm:$0xff]
        %v382 = vld [vmem:[%s225 + $0x1b0] sm:$0xff]
        %v383 = vld [vmem:[%s225 + $0x1b8] sm:$0xff]
        %v384 = vld [vmem:[%s225 + $0x1c0] sm:$0xff]
        %v385 = vld [vmem:[%s225 + $0x1c8] sm:$0xff]
        %v386 = vld [vmem:[%s225 + $0x1d0] sm:$0xff]
        %v387 = vld [vmem:[%s225 + $0x1d8] sm:$0xff]
        %v388 = vld [vmem:[%s225 + $0x1e0] sm:$0xff]
        %v389 = vld [vmem:[%s225 + $0x1e8] sm:$0xff]
        %v390 = vld [vmem:[%s225 + $0x1f0] sm:$0xff]
        %v391 = vld [vmem:[%s225 + $0x1f8] sm:$0xff]
        %v392 = vld [vmem:[%s225 + $0x200] sm:$0xff]
        %v393 = vld [vmem:[%s225 + $0x208] sm:$0xff]
        %v394 = vld [vmem:[%s225 + $0x210] sm:$0xff]
        %v395 = vld [vmem:[%s225 + $0x218] sm:$0xff]
        %v396 = vld [vmem:[%s225 + $0x220] sm:$0xff]
        %v397 = vld [vmem:[%s225 + $0x228] sm:$0xff]
        %v398 = vld [vmem:[%s225 + $0x230] sm:$0xff]
        %v399 = vld [vmem:[%s225 + $0x238] sm:$0xff]
        %v400 = vld [vmem:[%s225 + $0x240] sm:$0xff]
        %v401 = vld [vmem:[%s225 + $0x248] sm:$0xff]
        %v402 = vld [vmem:[%s225 + $0x250] sm:$0xff]
        %v403 = vld [vmem:[%s225 + $0x258] sm:$0xff]
        %v404 = vld [vmem:[%s225 + $0x260] sm:$0xff]
        %v405 = vld [vmem:[%s225 + $0x268] sm:$0xff]
        %v406 = vld [vmem:[%s225 + $0x270] sm:$0xff]
        %v407 = vld [vmem:[%s225 + $0x278] sm:$0xff]
        %v408 = vld [vmem:[%s225 + $0x280] sm:$0xff]
        %v409 = vld [vmem:[%s225 + $0x288] sm:$0xff]
        %v410 = vld [vmem:[%s225 + $0x290] sm:$0xff]
        %v411 = vld [vmem:[%s225 + $0x298] sm:$0xff]
        %v412 = vld [vmem:[%s225 + $0x2a0] sm:$0xff]
        %v413 = vld [vmem:[%s225 + $0x2a8] sm:$0xff]
        %v414 = vld [vmem:[%s225 + $0x2b0] sm:$0xff]
        %v415 = vld [vmem:[%s225 + $0x2b8] sm:$0xff]
        %v416 = vld [vmem:[%s225 + $0x2c0] sm:$0xff]
        %v417 = vld [vmem:[%s225 + $0x2c8] sm:$0xff]
        %v418 = vld [vmem:[%s225 + $0x2d0] sm:$0xff]
        %v419 = vld [vmem:[%s225 + $0x2d8] sm:$0xff]
        %v420 = vld [vmem:[%s225 + $0x2e0] sm:$0xff]
        %v421 = vld [vmem:[%s225 + $0x2e8] sm:$0xff]
        %v422 = vld [vmem:[%s225 + $0x2f0] sm:$0xff]
        %v423 = vld [vmem:[%s225 + $0x2f8] sm:$0xff]
        %v424 = vld [vmem:[%s225 + $0x300] sm:$0xff]
        %v425 = vld [vmem:[%s225 + $0x308] sm:$0xff]
        %v426 = vld [vmem:[%s225 + $0x310] sm:$0xff]
        %v427 = vld [vmem:[%s225 + $0x318] sm:$0xff]
        %v428 = vld [vmem:[%s225 + $0x320] sm:$0xff]
        %v429 = vld [vmem:[%s225 + $0x328] sm:$0xff]
        %v430 = vld [vmem:[%s225 + $0x330] sm:$0xff]
        %v431 = vld [vmem:[%s225 + $0x338] sm:$0xff]
        %v432 = vld [vmem:[%s225 + $0x340] sm:$0xff]
        %v433 = vld [vmem:[%s225 + $0x348] sm:$0xff]
        %v434 = vld [vmem:[%s225 + $0x350] sm:$0xff]
        %v435 = vld [vmem:[%s225 + $0x358] sm:$0xff]
        %v436 = vld [vmem:[%s225 + $0x360] sm:$0xff]
        %v437 = vld [vmem:[%s225 + $0x368] sm:$0xff]
        %v438 = vld [vmem:[%s225 + $0x370] sm:$0xff]
        %v439 = vld [vmem:[%s225 + $0x378] sm:$0xff]
        %v440 = vld [vmem:[%s225 + $0x380] sm:$0xff]
        %v441 = vld [vmem:[%s225 + $0x388] sm:$0xff]
        %v442 = vld [vmem:[%s225 + $0x390] sm:$0xff]
        %v443 = vld [vmem:[%s225 + $0x398] sm:$0xff]
        %v444 = vld [vmem:[%s225 + $0x3a0] sm:$0xff]
        %v445 = vld [vmem:[%s225 + $0x3a8] sm:$0xff]
        %v446 = vld [vmem:[%s225 + $0x3b0] sm:$0xff]
        %v447 = vld [vmem:[%s225 + $0x3b8] sm:$0xff]
        %v448 = vld [vmem:[%s225 + $0x3c0] sm:$0xff]
        %v449 = vld [vmem:[%s225 + $0x3c8] sm:$0xff]
        %v450 = vld [vmem:[%s225 + $0x3d0] sm:$0xff]
        %v451 = vld [vmem:[%s225 + $0x3d8] sm:$0xff]
        %v452 = vld [vmem:[%s225 + $0x3e0] sm:$0xff]
        %v453 = vld [vmem:[%s225 + $0x3e8] sm:$0xff]
        %v454 = vld [vmem:[%s225 + $0x3f0] sm:$0xff]
        %v455 = vld [vmem:[%s225 + $0x3f8] sm:$0xff]
        %v456 = vld [vmem:[%s234] sm:$0x1]
        %v458 = vperm.slane %v456, 0
        %460 = vmatpush.msra.mxu0 %v343
        %461 = vmatpush.msra.mxu0 %v342
        %462 = vmatpush.msra.mxu0 %v341
        %463 = vmatpush.msra.mxu0 %v340
        %464 = vmatpush.msra.mxu0 %v339
        %465 = vmatpush.msra.mxu0 %v338
        %466 = vmatpush.msra.mxu0 %v337
        %467 = vmatpush.msra.mxu0 %v336
        %468 = vmatpush.msra.mxu0 %v335
        %469 = vmatpush.msra.mxu0 %v334
        %470 = vmatpush.msra.mxu0 %v333
        %471 = vmatpush.msra.mxu0 %v332
        %472 = vmatpush.msra.mxu0 %v331
        %473 = vmatpush.msra.mxu0 %v330
        %474 = vmatpush.msra.mxu0 %v329
        %475 = vmatpush.msra.mxu0 %v328
        %476 = vmatmul.f32.gmra.mxu0 %v264
        %v477 = vpop.f32.mrf.mxu0
        %v478 = vadd.f32 %v458, %v477
        %479 = vmatmul.f32.gmra.mxu0 %v272
        %v480 = vpop.f32.mrf.mxu0
        %v481 = vadd.f32 %v458, %v480
        %482 = vmatmul.f32.gmra.mxu0 %v280
        %v483 = vpop.f32.mrf.mxu0
        %v484 = vadd.f32 %v458, %v483
        %485 = vmatmul.f32.gmra.mxu0 %v288
        %v486 = vpop.f32.mrf.mxu0
        %v487 = vadd.f32 %v458, %v486
        %488 = vmatmul.f32.gmra.mxu0 %v296
        %v489 = vpop.f32.mrf.mxu0
        %v490 = vadd.f32 %v458, %v489
        %491 = vmatmul.f32.gmra.mxu0 %v304
        %v492 = vpop.f32.mrf.mxu0
        %v493 = vadd.f32 %v458, %v492
        %494 = vmatmul.f32.gmra.mxu0 %v312
        %v495 = vpop.f32.mrf.mxu0
        %v496 = vadd.f32 %v458, %v495
        %497 = vmatmul.f32.gmra.mxu0 %v320
        %v498 = vpop.f32.mrf.mxu0
        %v499 = vadd.f32 %v458, %v498
        %500 = vdwg.mxu0
        %501 = vmatpush.msra.mxu0 %v359
        %502 = vmatpush.msra.mxu0 %v358
        %503 = vmatpush.msra.mxu0 %v357
        %504 = vmatpush.msra.mxu0 %v356
        %505 = vmatpush.msra.mxu0 %v355
        %506 = vmatpush.msra.mxu0 %v354
        %507 = vmatpush.msra.mxu0 %v353
        %508 = vmatpush.msra.mxu0 %v352
        %509 = vmatpush.msra.mxu0 %v351
        %510 = vmatpush.msra.mxu0 %v350
        %511 = vmatpush.msra.mxu0 %v349
        %512 = vmatpush.msra.mxu0 %v348
        %513 = vmatpush.msra.mxu0 %v347
        %514 = vmatpush.msra.mxu0 %v346
        %515 = vmatpush.msra.mxu0 %v345
        %516 = vmatpush.msra.mxu0 %v344
        %517 = vmatmul.f32.gmra.mxu0 %v265
        %v518 = vpop.f32.mrf.mxu0
        %v519 = vadd.f32 %v478, %v518
        %520 = vmatmul.f32.gmra.mxu0 %v273
        %v521 = vpop.f32.mrf.mxu0
        %v522 = vadd.f32 %v481, %v521
        %523 = vmatmul.f32.gmra.mxu0 %v281
        %v524 = vpop.f32.mrf.mxu0
        %v525 = vadd.f32 %v484, %v524
        %526 = vmatmul.f32.gmra.mxu0 %v289
        %v527 = vpop.f32.mrf.mxu0
        %v528 = vadd.f32 %v487, %v527
        %529 = vmatmul.f32.gmra.mxu0 %v297
        %v530 = vpop.f32.mrf.mxu0
        %v531 = vadd.f32 %v490, %v530
        %532 = vmatmul.f32.gmra.mxu0 %v305
        %v533 = vpop.f32.mrf.mxu0
        %v534 = vadd.f32 %v493, %v533
        %535 = vmatmul.f32.gmra.mxu0 %v313
        %v536 = vpop.f32.mrf.mxu0
        %v537 = vadd.f32 %v496, %v536
        %538 = vmatmul.f32.gmra.mxu0 %v321
        %v539 = vpop.f32.mrf.mxu0
        %v540 = vadd.f32 %v499, %v539
        %541 = vdwg.mxu0
        %542 = vmatpush.msra.mxu0 %v375
        %543 = vmatpush.msra.mxu0 %v374
        %544 = vmatpush.msra.mxu0 %v373
        %545 = vmatpush.msra.mxu0 %v372
        %546 = vmatpush.msra.mxu0 %v371
        %547 = vmatpush.msra.mxu0 %v370
        %548 = vmatpush.msra.mxu0 %v369
        %549 = vmatpush.msra.mxu0 %v368
        %550 = vmatpush.msra.mxu0 %v367
        %551 = vmatpush.msra.mxu0 %v366
        %552 = vmatpush.msra.mxu0 %v365
        %553 = vmatpush.msra.mxu0 %v364
        %554 = vmatpush.msra.mxu0 %v363
        %555 = vmatpush.msra.mxu0 %v362
        %556 = vmatpush.msra.mxu0 %v361
        %557 = vmatpush.msra.mxu0 %v360
        %558 = vmatmul.f32.gmra.mxu0 %v266
        %v559 = vpop.f32.mrf.mxu0
        %v560 = vadd.f32 %v519, %v559
        %561 = vmatmul.f32.gmra.mxu0 %v274
        %v562 = vpop.f32.mrf.mxu0
        %v563 = vadd.f32 %v522, %v562
        %564 = vmatmul.f32.gmra.mxu0 %v282
        %v565 = vpop.f32.mrf.mxu0
        %v566 = vadd.f32 %v525, %v565
        %567 = vmatmul.f32.gmra.mxu0 %v290
        %v568 = vpop.f32.mrf.mxu0
        %v569 = vadd.f32 %v528, %v568
        %570 = vmatmul.f32.gmra.mxu0 %v298
        %v571 = vpop.f32.mrf.mxu0
        %v572 = vadd.f32 %v531, %v571
        %573 = vmatmul.f32.gmra.mxu0 %v306
        %v574 = vpop.f32.mrf.mxu0
        %v575 = vadd.f32 %v534, %v574
        %576 = vmatmul.f32.gmra.mxu0 %v314
        %v577 = vpop.f32.mrf.mxu0
        %v578 = vadd.f32 %v537, %v577
        %579 = vmatmul.f32.gmra.mxu0 %v322
        %v580 = vpop.f32.mrf.mxu0
        %v581 = vadd.f32 %v540, %v580
        %582 = vdwg.mxu0
        %583 = vmatpush.msra.mxu0 %v391
        %584 = vmatpush.msra.mxu0 %v390
        %585 = vmatpush.msra.mxu0 %v389
        %586 = vmatpush.msra.mxu0 %v388
        %587 = vmatpush.msra.mxu0 %v387
        %588 = vmatpush.msra.mxu0 %v386
        %589 = vmatpush.msra.mxu0 %v385
        %590 = vmatpush.msra.mxu0 %v384
        %591 = vmatpush.msra.mxu0 %v383
        %592 = vmatpush.msra.mxu0 %v382
        %593 = vmatpush.msra.mxu0 %v381
        %594 = vmatpush.msra.mxu0 %v380
        %595 = vmatpush.msra.mxu0 %v379
        %596 = vmatpush.msra.mxu0 %v378
        %597 = vmatpush.msra.mxu0 %v377
        %598 = vmatpush.msra.mxu0 %v376
        %599 = vmatmul.f32.gmra.mxu0 %v267
        %v600 = vpop.f32.mrf.mxu0
        %v601 = vadd.f32 %v560, %v600
        %602 = vmatmul.f32.gmra.mxu0 %v275
        %v603 = vpop.f32.mrf.mxu0
        %v604 = vadd.f32 %v563, %v603
        %605 = vmatmul.f32.gmra.mxu0 %v283
        %v606 = vpop.f32.mrf.mxu0
        %v607 = vadd.f32 %v566, %v606
        %608 = vmatmul.f32.gmra.mxu0 %v291
        %v609 = vpop.f32.mrf.mxu0
        %v610 = vadd.f32 %v569, %v609
        %611 = vmatmul.f32.gmra.mxu0 %v299
        %v612 = vpop.f32.mrf.mxu0
        %v613 = vadd.f32 %v572, %v612
        %614 = vmatmul.f32.gmra.mxu0 %v307
        %v615 = vpop.f32.mrf.mxu0
        %v616 = vadd.f32 %v575, %v615
        %617 = vmatmul.f32.gmra.mxu0 %v315
        %v618 = vpop.f32.mrf.mxu0
        %v619 = vadd.f32 %v578, %v618
        %620 = vmatmul.f32.gmra.mxu0 %v323
        %v621 = vpop.f32.mrf.mxu0
        %v622 = vadd.f32 %v581, %v621
        %623 = vdwg.mxu0
        %624 = vmatpush.msra.mxu0 %v407
        %625 = vmatpush.msra.mxu0 %v406
        %626 = vmatpush.msra.mxu0 %v405
        %627 = vmatpush.msra.mxu0 %v404
        %628 = vmatpush.msra.mxu0 %v403
        %629 = vmatpush.msra.mxu0 %v402
        %630 = vmatpush.msra.mxu0 %v401
        %631 = vmatpush.msra.mxu0 %v400
        %632 = vmatpush.msra.mxu0 %v399
        %633 = vmatpush.msra.mxu0 %v398
        %634 = vmatpush.msra.mxu0 %v397
        %635 = vmatpush.msra.mxu0 %v396
        %636 = vmatpush.msra.mxu0 %v395
        %637 = vmatpush.msra.mxu0 %v394
        %638 = vmatpush.msra.mxu0 %v393
        %639 = vmatpush.msra.mxu0 %v392
        %640 = vmatmul.f32.gmra.mxu0 %v268
        %v641 = vpop.f32.mrf.mxu0
        %v642 = vadd.f32 %v601, %v641
        %643 = vmatmul.f32.gmra.mxu0 %v276
        %v644 = vpop.f32.mrf.mxu0
        %v645 = vadd.f32 %v604, %v644
        %646 = vmatmul.f32.gmra.mxu0 %v284
        %v647 = vpop.f32.mrf.mxu0
        %v648 = vadd.f32 %v607, %v647
        %649 = vmatmul.f32.gmra.mxu0 %v292
        %v650 = vpop.f32.mrf.mxu0
        %v651 = vadd.f32 %v610, %v650
        %652 = vmatmul.f32.gmra.mxu0 %v300
        %v653 = vpop.f32.mrf.mxu0
        %v654 = vadd.f32 %v613, %v653
        %655 = vmatmul.f32.gmra.mxu0 %v308
        %v656 = vpop.f32.mrf.mxu0
        %v657 = vadd.f32 %v616, %v656
        %658 = vmatmul.f32.gmra.mxu0 %v316
        %v659 = vpop.f32.mrf.mxu0
        %v660 = vadd.f32 %v619, %v659
        %661 = vmatmul.f32.gmra.mxu0 %v324
        %v662 = vpop.f32.mrf.mxu0
        %v663 = vadd.f32 %v622, %v662
        %664 = vdwg.mxu0
        %665 = vmatpush.msra.mxu0 %v423
        %666 = vmatpush.msra.mxu0 %v422
        %667 = vmatpush.msra.mxu0 %v421
        %668 = vmatpush.msra.mxu0 %v420
        %669 = vmatpush.msra.mxu0 %v419
        %670 = vmatpush.msra.mxu0 %v418
        %671 = vmatpush.msra.mxu0 %v417
        %672 = vmatpush.msra.mxu0 %v416
        %673 = vmatpush.msra.mxu0 %v415
        %674 = vmatpush.msra.mxu0 %v414
        %675 = vmatpush.msra.mxu0 %v413
        %676 = vmatpush.msra.mxu0 %v412
        %677 = vmatpush.msra.mxu0 %v411
        %678 = vmatpush.msra.mxu0 %v410
        %679 = vmatpush.msra.mxu0 %v409
        %680 = vmatpush.msra.mxu0 %v408
        %681 = vmatmul.f32.gmra.mxu0 %v269
        %v682 = vpop.f32.mrf.mxu0
        %v683 = vadd.f32 %v642, %v682
        %684 = vmatmul.f32.gmra.mxu0 %v277
        %v685 = vpop.f32.mrf.mxu0
        %v686 = vadd.f32 %v645, %v685
        %687 = vmatmul.f32.gmra.mxu0 %v285
        %v688 = vpop.f32.mrf.mxu0
        %v689 = vadd.f32 %v648, %v688
        %690 = vmatmul.f32.gmra.mxu0 %v293
        %v691 = vpop.f32.mrf.mxu0
        %v692 = vadd.f32 %v651, %v691
        %693 = vmatmul.f32.gmra.mxu0 %v301
        %v694 = vpop.f32.mrf.mxu0
        %v695 = vadd.f32 %v654, %v694
        %696 = vmatmul.f32.gmra.mxu0 %v309
        %v697 = vpop.f32.mrf.mxu0
        %v698 = vadd.f32 %v657, %v697
        %699 = vmatmul.f32.gmra.mxu0 %v317
        %v700 = vpop.f32.mrf.mxu0
        %v701 = vadd.f32 %v660, %v700
        %702 = vmatmul.f32.gmra.mxu0 %v325
        %v703 = vpop.f32.mrf.mxu0
        %v704 = vadd.f32 %v663, %v703
        %705 = vdwg.mxu0
        %706 = vmatpush.msra.mxu0 %v439
        %707 = vmatpush.msra.mxu0 %v438
        %708 = vmatpush.msra.mxu0 %v437
        %709 = vmatpush.msra.mxu0 %v436
        %710 = vmatpush.msra.mxu0 %v435
        %711 = vmatpush.msra.mxu0 %v434
        %712 = vmatpush.msra.mxu0 %v433
        %713 = vmatpush.msra.mxu0 %v432
        %714 = vmatpush.msra.mxu0 %v431
        %715 = vmatpush.msra.mxu0 %v430
        %716 = vmatpush.msra.mxu0 %v429
        %717 = vmatpush.msra.mxu0 %v428
        %718 = vmatpush.msra.mxu0 %v427
        %719 = vmatpush.msra.mxu0 %v426
        %720 = vmatpush.msra.mxu0 %v425
        %721 = vmatpush.msra.mxu0 %v424
        %722 = vmatmul.f32.gmra.mxu0 %v270
        %v723 = vpop.f32.mrf.mxu0
        %v724 = vadd.f32 %v683, %v723
        %725 = vmatmul.f32.gmra.mxu0 %v278
        %v726 = vpop.f32.mrf.mxu0
        %v727 = vadd.f32 %v686, %v726
        %728 = vmatmul.f32.gmra.mxu0 %v286
        %v729 = vpop.f32.mrf.mxu0
        %v730 = vadd.f32 %v689, %v729
        %731 = vmatmul.f32.gmra.mxu0 %v294
        %v732 = vpop.f32.mrf.mxu0
        %v733 = vadd.f32 %v692, %v732
        %734 = vmatmul.f32.gmra.mxu0 %v302
        %v735 = vpop.f32.mrf.mxu0
        %v736 = vadd.f32 %v695, %v735
        %737 = vmatmul.f32.gmra.mxu0 %v310
        %v738 = vpop.f32.mrf.mxu0
        %v739 = vadd.f32 %v698, %v738
        %740 = vmatmul.f32.gmra.mxu0 %v318
        %v741 = vpop.f32.mrf.mxu0
        %v742 = vadd.f32 %v701, %v741
        %743 = vmatmul.f32.gmra.mxu0 %v326
        %v744 = vpop.f32.mrf.mxu0
        %v745 = vadd.f32 %v704, %v744
        %746 = vdwg.mxu0
        %747 = vmatpush.msra.mxu0 %v455
        %748 = vmatpush.msra.mxu0 %v454
        %749 = vmatpush.msra.mxu0 %v453
        %750 = vmatpush.msra.mxu0 %v452
        %751 = vmatpush.msra.mxu0 %v451
        %752 = vmatpush.msra.mxu0 %v450
        %753 = vmatpush.msra.mxu0 %v449
        %754 = vmatpush.msra.mxu0 %v448
        %755 = vmatpush.msra.mxu0 %v447
        %756 = vmatpush.msra.mxu0 %v446
        %757 = vmatpush.msra.mxu0 %v445
        %758 = vmatpush.msra.mxu0 %v444
        %759 = vmatpush.msra.mxu0 %v443
        %760 = vmatpush.msra.mxu0 %v442
        %761 = vmatpush.msra.mxu0 %v441
        %762 = vmatpush.msra.mxu0 %v440
        %763 = vmatmul.f32.gmra.mxu0 %v271
        %v764 = vpop.f32.mrf.mxu0
        %v765 = vadd.f32 %v724, %v764
        %766 = vmatmul.f32.gmra.mxu0 %v279
        %v767 = vpop.f32.mrf.mxu0
        %v768 = vadd.f32 %v727, %v767
        %769 = vmatmul.f32.gmra.mxu0 %v287
        %v770 = vpop.f32.mrf.mxu0
        %v771 = vadd.f32 %v730, %v770
        %772 = vmatmul.f32.gmra.mxu0 %v295
        %v773 = vpop.f32.mrf.mxu0
        %v774 = vadd.f32 %v733, %v773
        %775 = vmatmul.f32.gmra.mxu0 %v303
        %v776 = vpop.f32.mrf.mxu0
        %v777 = vadd.f32 %v736, %v776
        %778 = vmatmul.f32.gmra.mxu0 %v311
        %v779 = vpop.f32.mrf.mxu0
        %v780 = vadd.f32 %v739, %v779
        %781 = vmatmul.f32.gmra.mxu0 %v319
        %v782 = vpop.f32.mrf.mxu0
        %v783 = vadd.f32 %v742, %v782
        %784 = vmatmul.f32.gmra.mxu0 %v327
        %v785 = vpop.f32.mrf.mxu0
        %v786 = vadd.f32 %v745, %v785
        %787 = vdwg.mxu0
        %v788 = vmax.f32 %v765, 0.0
        %v789 = vmax.f32 %v768, 0.0
        %v790 = vmax.f32 %v771, 0.0
        %v791 = vmax.f32 %v774, 0.0
        %v792 = vmax.f32 %v777, 0.0
        %v793 = vmax.f32 %v780, 0.0
        %v794 = vmax.f32 %v783, 0.0
        %v795 = vmax.f32 %v786, 0.0
        %796 = vst [vmem:[%s261] sm:$0xff] %v788
        %797 = vst [vmem:[%s261 + $0x8] sm:$0xff] %v789
        %798 = vst [vmem:[%s261 + $0x10] sm:$0xff] %v790
        %799 = vst [vmem:[%s261 + $0x18] sm:$0xff] %v791
        %800 = vst [vmem:[%s261 + $0x20] sm:$0xff] %v792
        %801 = vst [vmem:[%s261 + $0x28] sm:$0xff] %v793
        %802 = vst [vmem:[%s261 + $0x30] sm:$0xff] %v794
        %803 = vst [vmem:[%s261 + $0x38] sm:$0xff] %v795
        %s804 = sand.u32 %s121, 1
        %s805 = scalar_lea.sflag [#allocation4], %s804
        %s806 = sand.u32 %s121, 1
        %s807 = smul.addr %s806, 64
        %s808 = scalar_lea.vmem [#allocation8], %s807
        // Predicated region
        $region45: #{tpu_custom_call.1} parent=31 // pred_check
          %p809 = pneg %p131
        $region46: #{tpu_custom_call.1} parent=31 // pred_check_branch
          %811 = sbr.rel (%p809) target = $region48
        $region47: #{tpu_custom_call.1} parent=31 // pred_region
          %s812 = smul.u32 8, %s25
          %814 = vsyncadd %s805, 0
          %s815 = smul.addr %s812, 2
          %s816 = sadd.s32 %s26, %s815
          %s817 = smul.addr %s816, 8
          %s818 = scalar_lea.hbm %s3, %s817
          %s819 = sshll.u32 %s808, 4
          %s820 = int_to_ptr.vmem [resolvable:$true] %s819
          %s821 = sshll.u32 %s818, 4
          %s822 = int_to_ptr.hbm [resolvable:$true] %s821
          %827 = dma.vmem_to_hbm [thread:$0]  %s820, 1024, %s822, %s805, 128, 256, 8
        $region48: #{tpu_custom_call.1} parent=31 // pred_fallthru
          _
      $region32: #{tpu_custom_call.1} parent=5 // pred_fallthru
        _
      %p828 = scmp.le.s32.totalorder 2, %s16
      // Predicated region
      $region49: #{tpu_custom_call.1} parent=5 // pred_check
        %p829 = pneg %p828
      $region50: #{tpu_custom_call.1} parent=5 // pred_check_branch
        %831 = sbr.rel (%p829) target = $region52
      $region51: #{tpu_custom_call.1} parent=5 // pred_region
        %s832 = ssub.s32 %s16, 2
        // Predicated region
        $region53: #{tpu_custom_call.1} parent=51 // pred_check
          %p833 = pneg %p137
        $region54: #{tpu_custom_call.1} parent=51 // pred_check_branch
          %835 = sbr.rel (%p833) target = $region56
        $region55: #{tpu_custom_call.1} parent=51 // pred_region
          %s836 = sand.u32 %s122, 1
          %s837 = scalar_lea.sflag [#allocation4], %s836
          %s838 = sand.u32 %s122, 1
          %s839 = smul.addr %s838, 64
          %s840 = scalar_lea.vmem [#allocation8], %s839
          %842 = dma.done %s837, 1024
        $region56: #{tpu_custom_call.1} parent=51 // pred_fallthru
          _
      $region52: #{tpu_custom_call.1} parent=5 // pred_fallthru
        _
    $region6: #{tpu_custom_call.1} parent=1 // loop_footer
      %s20 = sadd.s32 1, %s16
    $region7: #{tpu_custom_call.1} parent=1 // loop_footer_branch
      %15 = sbr.rel target = $region3
    $region8: #{tpu_custom_call.1} parent=1 // loop_exit
      _
    %843 = vsyncpa [#allocation3], 1
    %s844 = scalar_lea.sflag [#allocation3], 1
    %845 = vsyncpa %s844, 1
    %846 = vsyncpa [#allocation6], 1
    %s847 = scalar_lea.sflag [#allocation6], 1
    %848 = vsyncpa %s847, 1
    %849 = vsyncpa [#allocation4], 1
    %s850 = scalar_lea.sflag [#allocation4], 1
    %851 = vsyncpa %s850, 1

</llo_original>
